<compile_context>
chip_gen: v5e
topology: v5e:2x2
jax: 0.10.0
libtpu: 0.0.40
codegen_flags: <defaults>
</compile_context>

<pallas_src>
import functools

import jax
import jax.numpy as jnp
from jax.experimental import pallas as pl
from jax.experimental.pallas import tpu as pltpu


def _round_up(n, m):
    return ((n + m - 1) // m) * m


def _vmem_capacity_bytes():
    """Per-generation VMEM capacity; conservative fallback if query fails."""
    try:
        return int(pltpu.get_tpu_info().vmem_capacity_bytes)
    except Exception:
        return 64 << 20            # v7x per-TensorCore VMEM (smallest of the three)


def _resident_spec(shape, single_buffer):
    """BlockSpec for a block-invariant (resident) operand.

    With `single_buffer`, requests pl.Buffered(1) so the invariant block is not
    double-buffered (halves resident-weight VMEM -- matters under v7x's 64 MiB).
    Falls back to a default spec if the pipeline_mode isn't accepted.
    """
    index_map = lambda i: (0,) * len(shape)
    if single_buffer:
        try:
            return pl.BlockSpec(shape, index_map, pipeline_mode=pl.Buffered(1))
        except Exception:
            pass
    return pl.BlockSpec(shape, index_map)


def _mlp_kernel(x_ref, w1_ref, w2_ref, w3_ref, b_ref, h2_ref, out_ref, *, H1P, H2P, CP):
    """Fused 3-layer MLP on one (TB, DP) activation tile.

    Weights are resident in VMEM, padded to multiples of 128 on every dim with
    zeros, so the math is identical to the unpadded model.  MXU operands may be
    bf16; accumulation + bias add + relu stay f32 (v5e's VPU has no bf16 path).
    Both outputs are 128-padded -> full-width unmasked stores.
    """
    mxu_dt = w1_ref.dtype

    # Packed resident biases (all slice boundaries are multiples of 128).
    b1 = b_ref[:, 0:H1P]
    b2 = b_ref[:, H1P:H1P + H2P]
    b3 = b_ref[:, H1P + H2P:H1P + H2P + CP]

    x = x_ref[...]
    if x.dtype != mxu_dt:            # no-op in the default bf16 path
        x = x.astype(mxu_dt)

    h1 = jnp.dot(x, w1_ref[...], preferred_element_type=jnp.float32) + b1
    h1 = jnp.maximum(h1, 0.0)                                   # relu, f32 on VPU

    h2 = jnp.dot(h1.astype(mxu_dt), w2_ref[...],
                 preferred_element_type=jnp.float32) + b2       # pre-relu output

    out = jnp.dot(h2.astype(mxu_dt), w3_ref[...],
                  preferred_element_type=jnp.float32) + b3

    h2_ref[...] = h2.astype(h2_ref.dtype)
    out_ref[...] = out.astype(out_ref.dtype)


def prepare_params(params, mxu_dtype=jnp.bfloat16):
    """One-time (outside the hot path) weight layout prep.

    Takes PyTorch-layout params {wN: (out,in), bN: (out,)} and returns
    (in,out)-layout weights padded to multiples of 128 plus a single packed
    f32 bias buffer.  Padded rows/cols are zero, so results are unchanged.
    Default mxu_dtype is bf16 (native MXU operand type on v5e/v6e/v7x);
    pass jnp.float32 for a bit-exact "exactness" mode.
    """
    w1, b1 = params["w1"], params["b1"]          # (H1, D), (H1,)
    w2, b2 = params["w2"], params["b2"]          # (H2, H1), (H2,)
    w3, b3 = params["w3"], params["b3"]          # (C,  H2), (C,)
    H1, D = w1.shape
    H2 = w2.shape[0]
    C = w3.shape[0]
    DP, H1P, H2P, CP = (_round_up(d, 128) for d in (D, H1, H2, C))

    def pad_t(w, rows_p, cols_p):
        wt = jnp.asarray(w, jnp.float32).T       # -> (in, out)
        wt = jnp.pad(wt, ((0, rows_p - wt.shape[0]), (0, cols_p - wt.shape[1])))
        return wt.astype(mxu_dtype)

    b_packed = jnp.concatenate([
        jnp.pad(jnp.asarray(b1, jnp.float32), (0, H1P - H1)),
        jnp.pad(jnp.asarray(b2, jnp.float32), (0, H2P - H2)),
        jnp.pad(jnp.asarray(b3, jnp.float32), (0, CP - C)),
    ])[None, :]                                   # (1, H1P + H2P + CP), f32

    return {
        "w1": pad_t(w1, DP, H1P),
        "w2": pad_t(w2, H1P, H2P),
        "w3": pad_t(w3, H2P, CP),
        "b": b_packed,
    }


def retrain_dnn_forward(x, bufs, out_dims, single_buffer_weights=True):
    """Forward pass.  `bufs` from prepare_params; out_dims=(H2, n_classes) is static."""
    H2, C = out_dims
    w1, w2, w3, b = bufs["w1"], bufs["w2"], bufs["w3"], bufs["b"]
    mxu_dt = w1.dtype

    B, D = x.shape
    DP, H1P = w1.shape
    H2P = w2.shape[1]
    CP = w3.shape[1]

    # Feed activations in the MXU dtype (bf16 by default): halves the dominant
    # HBM input stream and the double-buffered input VMEM.
    x = x.astype(mxu_dt)
    if D != DP:                                   # static check; no-op for CIFAR D=3072
        x = jnp.pad(x, ((0, 0), (0, DP - D)))

    # Batch tile: full batch for small B; otherwise up to 512 rows while keeping
    # at least 2 grid steps so v7x's two TensorCores both get work on the
    # "parallel" batch axis.
    if B <= 256:
        TB = B
    else:
        TB = min(512, _round_up(-(-B // 2), 128))
    grid = (pl.cdiv(B, TB),)

    # --- Explicit VMEM budget ---------------------------------------------
    x_it = jnp.dtype(x.dtype).itemsize
    w_it = jnp.dtype(mxu_dt).itemsize
    # Pipelined streams: input tile + two output tiles, double-buffered.
    stream_bytes = 2 * (TB * DP * x_it + TB * (H2P + CP) * 4)
    # Resident weights + packed bias (single- or double-buffered).
    nbuf = 1 if single_buffer_weights else 2
    wgt_bytes = nbuf * ((DP * H1P + H1P * H2P + H2P * CP) * w_it
                        + (H1P + H2P + CP) * 4)
    # In-kernel intermediates: h1 (f32) + its MXU-dtype cast, h2 (f32) + cast,
    # out (f32), and (only in the f32-input/bf16-weight mix) an x cast.
    interm_bytes = TB * (H1P * (4 + w_it) + H2P * (4 + w_it) + CP * 4)
    if x_it != w_it:
        interm_bytes += TB * DP * w_it
    vmem_limit = int((stream_bytes + wgt_bytes + interm_bytes) * 1.2) + (4 << 20)
    vmem_limit = max(vmem_limit, 32 << 20)                       # sane floor
    vmem_limit = min(vmem_limit, int(0.9 * _vmem_capacity_bytes()))  # per-gen cap

    kernel = functools.partial(_mlp_kernel, H1P=H1P, H2P=H2P, CP=CP)

    h2_pad, out_pad = pl.pallas_call(
        kernel,
        out_shape=(jax.ShapeDtypeStruct((B, H2P), jnp.float32),
                   jax.ShapeDtypeStruct((B, CP), jnp.float32)),
        grid=grid,
        in_specs=[
            pl.BlockSpec((TB, DP), lambda i: (i, 0)),              # activations: pipelined
            _resident_spec((DP, H1P), single_buffer_weights),      # W1: resident
            _resident_spec((H1P, H2P), single_buffer_weights),     # W2: resident
            _resident_spec((H2P, CP), single_buffer_weights),      # W3: resident
            _resident_spec((1, H1P + H2P + CP), single_buffer_weights),  # packed biases
        ],
        out_specs=(pl.BlockSpec((TB, H2P), lambda i: (i, 0)),
                   pl.BlockSpec((TB, CP), lambda i: (i, 0))),
        compiler_params=pltpu.CompilerParams(
            dimension_semantics=("parallel",),
            vmem_limit_bytes=vmem_limit,
        ),
    )(x, w1, w2, w3, b)

    # Exact PyTorch shapes.  (Downstream code could consume the 128-padded
    # slabs directly -- the padded tail columns are exactly zero-bias garbage
    # rows of zero-padded weights, i.e. constant per row -- to skip even these
    # cheap prefix slices.)
    return h2_pad[:, :H2], out_pad[:, :C]


def init_params(key, input_dim, hidden_dims, n_classes):
    """Deterministic init mimicking nn.Linear default U(-1/sqrt(fan_in), +1/sqrt(fan_in))."""
    dims = [(hidden_dims[0], input_dim),
            (hidden_dims[1], hidden_dims[0]),
            (n_classes, hidden_dims[1])]
    params = {}
    keys = jax.random.split(key, 6)
    for i, (out_f, in_f) in enumerate(dims):
        bound = 1.0 / (in_f ** 0.5)
        params[f"w{i+1}"] = jax.random.uniform(
            keys[2 * i], (out_f, in_f), jnp.float32, -bound, bound)
        params[f"b{i+1}"] = jax.random.uniform(
            keys[2 * i + 1], (out_f,), jnp.float32, -bound, bound)
    return params


if __name__ == "__main__":
    # Small shapes consistent with the module: flattened image features in,
    # two hidden layers, class logits out.
    B = 8
    input_dim = 128
    hidden_dims = [64, 32]
    n_classes = 10
    out_dims = (hidden_dims[1], n_classes)

    key = jax.random.PRNGKey(0)
    k_x, k_p, k_xr = jax.random.split(key, 3)
    x = jax.random.normal(k_x, (B, input_dim), jnp.float32)
    params = init_params(k_p, input_dim, hidden_dims, n_classes)

    def gold(xv):
        h1 = jnp.maximum(xv @ params["w1"].T + params["b1"], 0.0)
        h2 = h1 @ params["w2"].T + params["b2"]
        return h2, h2 @ params["w3"].T + params["b3"]

    h2_gold, out_gold = gold(x)

    fwd = jax.jit(retrain_dnn_forward,
                  static_argnames=("out_dims", "single_buffer_weights"))

    # --- default mode: bf16 MXU operands + bf16 activation stream ----------
    bufs_bf16 = prepare_params(params)                 # mxu_dtype defaults to bf16
    single_buffer = True
    try:
        h2b, outb = fwd(x, bufs_bf16, out_dims=out_dims, single_buffer_weights=True)
        jax.block_until_ready((h2b, outb))
    except Exception:
        # Fallback if single-buffered (Buffered(1)) resident specs are rejected.
        single_buffer = False
        h2b, outb = fwd(x, bufs_bf16, out_dims=out_dims, single_buffer_weights=False)
        jax.block_until_ready((h2b, outb))
    assert h2b.shape == h2_gold.shape and outb.shape == out_gold.shape
    # bf16 operands (f32 accumulate) -> loose tolerance; h2 is the bf16-rounded
    # activation, not the bit-exact f32 PyTorch value.
    assert jnp.allclose(h2b, h2_gold, atol=5e-2, rtol=5e-2)
    assert jnp.allclose(outb, out_gold, atol=5e-2, rtol=5e-2)

    # --- f32 exactness mode -------------------------------------------------
    bufs_f32 = prepare_params(params, mxu_dtype=jnp.float32)
    h2, out = fwd(x, bufs_f32, out_dims=out_dims, single_buffer_weights=single_buffer)
    jax.block_until_ready((h2, out))
    assert jnp.allclose(h2, h2_gold, atol=1e-4, rtol=1e-4)
    assert jnp.allclose(out, out_gold, atol=1e-4, rtol=1e-4)

    # --- ragged batch: B not a multiple of the batch tile (masked last block) ---
    Br = 300
    xr = jax.random.normal(k_xr, (Br, input_dim), jnp.float32)
    h2r_gold, outr_gold = gold(xr)
    h2r, outr = fwd(xr, bufs_f32, out_dims=out_dims, single_buffer_weights=single_buffer)
    jax.block_until_ready((h2r, outr))
    assert h2r.shape == h2r_gold.shape and outr.shape == outr_gold.shape
    assert jnp.allclose(h2r, h2r_gold, atol=1e-4, rtol=1e-4)
    assert jnp.allclose(outr, outr_gold, atol=1e-4, rtol=1e-4)

    print("KERNEL_OK")
</pallas_src>

<mosaic_0001>
module attributes {stable_mosaic.version = 11 : i64} {
  func.func @_mlp_kernel(%arg0: i32, %arg1: memref<8x128xbf16, #tpu.memory_space<vmem>>, %arg2: memref<128x128xbf16, #tpu.memory_space<vmem>>, %arg3: memref<128x128xbf16, #tpu.memory_space<vmem>>, %arg4: memref<128x128xbf16, #tpu.memory_space<vmem>>, %arg5: memref<1x384xf32, #tpu.memory_space<vmem>>, %arg6: memref<8x128xf32, #tpu.memory_space<vmem>>, %arg7: memref<8x128xf32, #tpu.memory_space<vmem>>) attributes {dimension_semantics = [#tpu.dimension_semantics<parallel>], iteration_bounds = array<i64: 1>, scalar_prefetch = 0 : i64, scratch_operands = 0 : i64, tpu.core_type = #tpu.core_type<tc>, window_params = [{transform_indices = @transform_0, window_bounds = array<i64: 8, 128>}, {pipeline_mode = #tpu.pipeline_mode<synchronous>, transform_indices = @transform_1, window_bounds = array<i64: 128, 128>}, {pipeline_mode = #tpu.pipeline_mode<synchronous>, transform_indices = @transform_2, window_bounds = array<i64: 128, 128>}, {pipeline_mode = #tpu.pipeline_mode<synchronous>, transform_indices = @transform_3, window_bounds = array<i64: 128, 128>}, {pipeline_mode = #tpu.pipeline_mode<synchronous>, transform_indices = @transform_4, window_bounds = array<i64: 1, 384>}, {transform_indices = @transform_5, window_bounds = array<i64: 8, 128>}, {transform_indices = @transform_6, window_bounds = array<i64: 8, 128>}]} {
    %c0 = arith.constant 0 : index
    %c0_0 = arith.constant 0 : index
    %0 = vector.load %arg5[%c0, %c0_0] : memref<1x384xf32, #tpu.memory_space<vmem>>, vector<1x128xf32>
    %c0_1 = arith.constant 0 : index
    %c128 = arith.constant 128 : index
    %1 = vector.load %arg5[%c0_1, %c128] : memref<1x384xf32, #tpu.memory_space<vmem>>, vector<1x128xf32>
    %c0_2 = arith.constant 0 : index
    %c256 = arith.constant 256 : index
    %2 = vector.load %arg5[%c0_2, %c256] : memref<1x384xf32, #tpu.memory_space<vmem>>, vector<1x128xf32>
    %c0_3 = arith.constant 0 : index
    %c0_4 = arith.constant 0 : index
    %3 = vector.load %arg1[%c0_3, %c0_4] : memref<8x128xbf16, #tpu.memory_space<vmem>>, vector<8x128xbf16>
    %c0_5 = arith.constant 0 : index
    %c0_6 = arith.constant 0 : index
    %4 = vector.load %arg2[%c0_5, %c0_6] : memref<128x128xbf16, #tpu.memory_space<vmem>>, vector<128x128xbf16>
    %cst = arith.constant dense<0.000000e+00> : vector<8x128xf32>
    %5 = tpu.matmul %3, %4, %cst {dimension_numbers = #tpu.dot_dimension_numbers<[1], [0], [0], [1], [0, 0, 1, 1], [], []>} : vector<8x128xbf16>, vector<128x128xbf16>, vector<8x128xf32> -> vector<8x128xf32>
    %6 = vector.broadcast %0 : vector<1x128xf32> to vector<8x128xf32>
    %7 = arith.addf %5, %6 : vector<8x128xf32>
    %cst_7 = arith.constant 0.000000e+00 : f32
    %8 = vector.broadcast %cst_7 : f32 to vector<8x128xf32>
    %9 = arith.maximumf %7, %8 : vector<8x128xf32>
    %10 = arith.truncf %9 : vector<8x128xf32> to vector<8x128xbf16>
    %c0_8 = arith.constant 0 : index
    %c0_9 = arith.constant 0 : index
    %11 = vector.load %arg3[%c0_8, %c0_9] : memref<128x128xbf16, #tpu.memory_space<vmem>>, vector<128x128xbf16>
    %cst_10 = arith.constant dense<0.000000e+00> : vector<8x128xf32>
    %12 = tpu.matmul %10, %11, %cst_10 {dimension_numbers = #tpu.dot_dimension_numbers<[1], [0], [0], [1], [0, 0, 1, 1], [], []>} : vector<8x128xbf16>, vector<128x128xbf16>, vector<8x128xf32> -> vector<8x128xf32>
    %13 = vector.broadcast %1 : vector<1x128xf32> to vector<8x128xf32>
    %14 = arith.addf %12, %13 : vector<8x128xf32>
    %15 = arith.truncf %14 : vector<8x128xf32> to vector<8x128xbf16>
    %c0_11 = arith.constant 0 : index
    %c0_12 = arith.constant 0 : index
    %16 = vector.load %arg4[%c0_11, %c0_12] : memref<128x128xbf16, #tpu.memory_space<vmem>>, vector<128x128xbf16>
    %cst_13 = arith.constant dense<0.000000e+00> : vector<8x128xf32>
    %17 = tpu.matmul %15, %16, %cst_13 {dimension_numbers = #tpu.dot_dimension_numbers<[1], [0], [0], [1], [0, 0, 1, 1], [], []>} : vector<8x128xbf16>, vector<128x128xbf16>, vector<8x128xf32> -> vector<8x128xf32>
    %18 = vector.broadcast %2 : vector<1x128xf32> to vector<8x128xf32>
    %19 = arith.addf %17, %18 : vector<8x128xf32>
    %c0_14 = arith.constant 0 : index
    %c0_15 = arith.constant 0 : index
    %20 = vector.load %arg6[%c0_14, %c0_15] : memref<8x128xf32, #tpu.memory_space<vmem>>, vector<8x128xf32>
    tpu.vector_store %arg6[%c0_14, %c0_15], %14 {strides = array<i32>} : memref<8x128xf32, #tpu.memory_space<vmem>>, vector<8x128xf32>,
    %c0_16 = arith.constant 0 : index
    %c0_17 = arith.constant 0 : index
    %21 = vector.load %arg7[%c0_16, %c0_17] : memref<8x128xf32, #tpu.memory_space<vmem>>, vector<8x128xf32>
    tpu.vector_store %arg7[%c0_16, %c0_17], %19 {strides = array<i32>} : memref<8x128xf32, #tpu.memory_space<vmem>>, vector<8x128xf32>,
    return
  }
  func.func @transform_0(%arg0: i32) -> (i32, i32) {
    %c0_i32 = arith.constant 0 : i32
    %c0_i32_0 = arith.constant 0 : i32
    return %arg0, %c0_i32 : i32, i32
  }
  func.func @transform_1(%arg0: i32) -> (i32, i32) {
    %c0_i32 = arith.constant 0 : i32
    %c0_i32_0 = arith.constant 0 : i32
    %c0_i32_1 = arith.constant 0 : i32
    return %c0_i32, %c0_i32_0 : i32, i32
  }
  func.func @transform_2(%arg0: i32) -> (i32, i32) {
    %c0_i32 = arith.constant 0 : i32
    %c0_i32_0 = arith.constant 0 : i32
    %c0_i32_1 = arith.constant 0 : i32
    return %c0_i32, %c0_i32_0 : i32, i32
  }
  func.func @transform_3(%arg0: i32) -> (i32, i32) {
    %c0_i32 = arith.constant 0 : i32
    %c0_i32_0 = arith.constant 0 : i32
    %c0_i32_1 = arith.constant 0 : i32
    return %c0_i32, %c0_i32_0 : i32, i32
  }
  func.func @transform_4(%arg0: i32) -> (i32, i32) {
    %c0_i32 = arith.constant 0 : i32
    %c0_i32_0 = arith.constant 0 : i32
    %c0_i32_1 = arith.constant 0 : i32
    return %c0_i32, %c0_i32_0 : i32, i32
  }
  func.func @transform_5(%arg0: i32) -> (i32, i32) {
    %c0_i32 = arith.constant 0 : i32
    %c0_i32_0 = arith.constant 0 : i32
    return %arg0, %c0_i32 : i32, i32
  }
  func.func @transform_6(%arg0: i32) -> (i32, i32) {
    %c0_i32 = arith.constant 0 : i32
    %c0_i32_0 = arith.constant 0 : i32
    return %arg0, %c0_i32 : i32, i32
  }
}

module attributes {stable_mosaic.version = 11 : i64} {
  func.func @_mlp_kernel(%arg0: i32, %arg1: memref<8x128xbf16, #tpu.memory_space<vmem>>, %arg2: memref<128x128xbf16, #tpu.memory_space<vmem>>, %arg3: memref<128x128xbf16, #tpu.memory_space<vmem>>, %arg4: memref<128x128xbf16, #tpu.memory_space<vmem>>, %arg5: memref<1x384xf32, #tpu.memory_space<vmem>>, %arg6: memref<8x128xf32, #tpu.memory_space<vmem>>, %arg7: memref<8x128xf32, #tpu.memory_space<vmem>>) attributes {dimension_semantics = [#tpu.dimension_semantics<parallel>], iteration_bounds = array<i64: 1>, scalar_prefetch = 0 : i64, scratch_operands = 0 : i64, tpu.core_type = #tpu.core_type<tc>, window_params = [{transform_indices = @transform_0, window_bounds = array<i64: 8, 128>}, {pipeline_mode = #tpu.pipeline_mode<synchronous>, transform_indices = @transform_1, window_bounds = array<i64: 128, 128>}, {pipeline_mode = #tpu.pipeline_mode<synchronous>, transform_indices = @transform_2, window_bounds = array<i64: 128, 128>}, {pipeline_mode = #tpu.pipeline_mode<synchronous>, transform_indices = @transform_3, window_bounds = array<i64: 128, 128>}, {pipeline_mode = #tpu.pipeline_mode<synchronous>, transform_indices = @transform_4, window_bounds = array<i64: 1, 384>}, {transform_indices = @transform_5, window_bounds = array<i64: 8, 128>}, {transform_indices = @transform_6, window_bounds = array<i64: 8, 128>}]} {
    %c0 = arith.constant 0 : index
    %c0_0 = arith.constant 0 : index
    %0 = vector.load %arg5[%c0, %c0_0] : memref<1x384xf32, #tpu.memory_space<vmem>>, vector<1x128xf32>
    %c0_1 = arith.constant 0 : index
    %c128 = arith.constant 128 : index
    %1 = vector.load %arg5[%c0_1, %c128] : memref<1x384xf32, #tpu.memory_space<vmem>>, vector<1x128xf32>
    %c0_2 = arith.constant 0 : index
    %c256 = arith.constant 256 : index
    %2 = vector.load %arg5[%c0_2, %c256] : memref<1x384xf32, #tpu.memory_space<vmem>>, vector<1x128xf32>
    %c0_3 = arith.constant 0 : index
    %c0_4 = arith.constant 0 : index
    %3 = vector.load %arg1[%c0_3, %c0_4] : memref<8x128xbf16, #tpu.memory_space<vmem>>, vector<8x128xbf16>
    %c0_5 = arith.constant 0 : index
    %c0_6 = arith.constant 0 : index
    %4 = vector.load %arg2[%c0_5, %c0_6] : memref<128x128xbf16, #tpu.memory_space<vmem>>, vector<128x128xbf16>
    %cst = arith.constant dense<0.000000e+00> : vector<8x128xf32>
    %5 = tpu.matmul %3, %4, %cst {dimension_numbers = #tpu.dot_dimension_numbers<[1], [0], [0], [1], [0, 0, 1, 1], [], []>} : vector<8x128xbf16>, vector<128x128xbf16>, vector<8x128xf32> -> vector<8x128xf32>
    %6 = vector.broadcast %0 : vector<1x128xf32> to vector<8x128xf32>
    %7 = arith.addf %5, %6 : vector<8x128xf32>
    %cst_7 = arith.constant 0.000000e+00 : f32
    %8 = vector.broadcast %cst_7 : f32 to vector<8x128xf32>
    %9 = arith.maximumf %7, %8 : vector<8x128xf32>
    %10 = arith.truncf %9 : vector<8x128xf32> to vector<8x128xbf16>
    %c0_8 = arith.constant 0 : index
    %c0_9 = arith.constant 0 : index
    %11 = vector.load %arg3[%c0_8, %c0_9] : memref<128x128xbf16, #tpu.memory_space<vmem>>, vector<128x128xbf16>
    %cst_10 = arith.constant dense<0.000000e+00> : vector<8x128xf32>
    %12 = tpu.matmul %10, %11, %cst_10 {dimension_numbers = #tpu.dot_dimension_numbers<[1], [0], [0], [1], [0, 0, 1, 1], [], []>} : vector<8x128xbf16>, vector<128x128xbf16>, vector<8x128xf32> -> vector<8x128xf32>
    %13 = vector.broadcast %1 : vector<1x128xf32> to vector<8x128xf32>
    %14 = arith.addf %12, %13 : vector<8x128xf32>
    %15 = arith.truncf %14 : vector<8x128xf32> to vector<8x128xbf16>
    %c0_11 = arith.constant 0 : index
    %c0_12 = arith.constant 0 : index
    %16 = vector.load %arg4[%c0_11, %c0_12] : memref<128x128xbf16, #tpu.memory_space<vmem>>, vector<128x128xbf16>
    %cst_13 = arith.constant dense<0.000000e+00> : vector<8x128xf32>
    %17 = tpu.matmul %15, %16, %cst_13 {dimension_numbers = #tpu.dot_dimension_numbers<[1], [0], [0], [1], [0, 0, 1, 1], [], []>} : vector<8x128xbf16>, vector<128x128xbf16>, vector<8x128xf32> -> vector<8x128xf32>
    %18 = vector.broadcast %2 : vector<1x128xf32> to vector<8x128xf32>
    %19 = arith.addf %17, %18 : vector<8x128xf32>
    %c0_14 = arith.constant 0 : index
    %c0_15 = arith.constant 0 : index
    %20 = vector.load %arg6[%c0_14, %c0_15] : memref<8x128xf32, #tpu.memory_space<vmem>>, vector<8x128xf32>
    tpu.vector_store %arg6[%c0_14, %c0_15], %14 {strides = array<i32>} : memref<8x128xf32, #tpu.memory_space<vmem>>, vector<8x128xf32>,
    %c0_16 = arith.constant 0 : index
    %c0_17 = arith.constant 0 : index
    %21 = vector.load %arg7[%c0_16, %c0_17] : memref<8x128xf32, #tpu.memory_space<vmem>>, vector<8x128xf32>
    tpu.vector_store %arg7[%c0_16, %c0_17], %19 {strides = array<i32>} : memref<8x128xf32, #tpu.memory_space<vmem>>, vector<8x128xf32>,
    return
  }
  func.func @transform_0(%arg0: i32) -> (i32, i32) {
    %c0_i32 = arith.constant 0 : i32
    %c0_i32_0 = arith.constant 0 : i32
    return %arg0, %c0_i32 : i32, i32
  }
  func.func @transform_1(%arg0: i32) -> (i32, i32) {
    %c0_i32 = arith.constant 0 : i32
    %c0_i32_0 = arith.constant 0 : i32
    %c0_i32_1 = arith.constant 0 : i32
    return %c0_i32, %c0_i32_0 : i32, i32
  }
  func.func @transform_2(%arg0: i32) -> (i32, i32) {
    %c0_i32 = arith.constant 0 : i32
    %c0_i32_0 = arith.constant 0 : i32
    %c0_i32_1 = arith.constant 0 : i32
    return %c0_i32, %c0_i32_0 : i32, i32
  }
  func.func @transform_3(%arg0: i32) -> (i32, i32) {
    %c0_i32 = arith.constant 0 : i32
    %c0_i32_0 = arith.constant 0 : i32
    %c0_i32_1 = arith.constant 0 : i32
    return %c0_i32, %c0_i32_0 : i32, i32
  }
  func.func @transform_4(%arg0: i32) -> (i32, i32) {
    %c0_i32 = arith.constant 0 : i32
    %c0_i32_0 = arith.constant 0 : i32
    %c0_i32_1 = arith.constant 0 : i32
    return %c0_i32, %c0_i32_0 : i32, i32
  }
  func.func @transform_5(%arg0: i32) -> (i32, i32) {
    %c0_i32 = arith.constant 0 : i32
    %c0_i32_0 = arith.constant 0 : i32
    return %arg0, %c0_i32 : i32, i32
  }
  func.func @transform_6(%arg0: i32) -> (i32, i32) {
    %c0_i32 = arith.constant 0 : i32
    %c0_i32_0 = arith.constant 0 : i32
    return %arg0, %c0_i32 : i32, i32
  }
}

</mosaic_0001>

<llo_original>
// kernel: retrain_dnn_forward.1
$region0: #{retrain_dnn_forward.1}
  #allocation0 [shape = 'u32[]', space=smem, size = 0x4, offset = 0x4, fixed_abs, tag = 'smem constant byte address 0x4 - core index']
  #allocation1 [shape = 'u32[72,128]{1,0:T(1,128)}', space=vmem, size = 0x9000, scoped, tag = 'internal scratch']
  %s0 = inlined_call_operand.vmem [shape: bf16[8,128], index: 0, kind: input, shape index: {}]
  %s1 = inlined_call_operand.hbm [shape: bf16[128,128], index: 1, kind: input, shape index: {}]
  %s2 = inlined_call_operand.hbm [shape: bf16[128,128], index: 2, kind: input, shape index: {}]
  %s3 = inlined_call_operand.hbm [shape: bf16[128,128], index: 3, kind: input, shape index: {}]
  %s4 = inlined_call_operand.vmem [shape: f32[1,384], index: 4, kind: input, shape index: {}]
  %s5 = inlined_call_operand.hbm [shape: f32[8,128], index: 5, kind: output, shape index: {0}]
  %s6 = inlined_call_operand.hbm [shape: f32[8,128], index: 6, kind: output, shape index: {1}]
  %7 = xla_tuple %s5, %s6
  %s8 = sld [smem:[#allocation0]]
  $region50: #{retrain_dnn_forward.1} parent=0
    _
  %s10 = ssub.s32 1, %s8
  %s11 = scalar_select 0, %s10, %s8
  $region1: #{retrain_dnn_forward.1} parent=0
    #allocation2 [shape = 'u8[32768]{0}', space=vmem, size = 0x8000, scoped, tag = 'input window, operand 1, single buffered']
    #allocation3 [shape = 's32[1]{0}', space=sflag, size = 0x4, scoped, tag = 'scoped memory for retrain_dnn_forward.1']
    #allocation4 [shape = 's32[1]{0}', space=sflag, size = 0x4, scoped, tag = 'scoped memory for retrain_dnn_forward.1']
    #allocation5 [shape = 'u8[32768]{0}', space=vmem, size = 0x8000, scoped, tag = 'input window, operand 2, single buffered']
    #allocation6 [shape = 's32[1]{0}', space=sflag, size = 0x4, scoped, tag = 'scoped memory for retrain_dnn_forward.1']
    #allocation7 [shape = 'u8[32768]{0}', space=vmem, size = 0x8000, scoped, tag = 'input window, operand 3, single buffered']
    #allocation8 [shape = 'u8[4096]{0}', space=vmem, size = 0x1000, scoped, tag = 'output window, operand 0, single buffered']
    #allocation9 [shape = 'u8[4096]{0}', space=vmem, size = 0x1000, scoped, tag = 'output window, operand 1, single buffered']
    #allocation10 [shape = 's32[1]{0}', space=sflag, size = 0x4, scoped, tag = 'scoped memory for retrain_dnn_forward.1']
    %12 = vsyncpa [#allocation3], 0
    %13 = vsyncpa [#allocation6], 0
    %14 = vsyncpa [#allocation4], 0
    %15 = vsyncpa [#allocation10], 0
    // Predicated region
    $region2: #{retrain_dnn_forward.1} parent=1 // pred_check
      _
    $region3: #{retrain_dnn_forward.1} parent=1 // pred_check_branch
      %17 = sbr.rel (0) target = $region5
    $region4: #{retrain_dnn_forward.1} parent=1 // pred_region
      _
    $region5: #{retrain_dnn_forward.1} parent=1 // pred_fallthru
      _
    // Predicated region
    $region6: #{retrain_dnn_forward.1} parent=1 // pred_check
      _
    $region7: #{retrain_dnn_forward.1} parent=1 // pred_check_branch
      %19 = sbr.rel (0) target = $region9
    $region8: #{retrain_dnn_forward.1} parent=1 // pred_region
      %21 = vsyncadd [#allocation3], 0
      %s22 = sshll.u32 %s1, 4
      %s23 = int_to_ptr.hbm [resolvable:$true] %s22
      %s24 = sshll.u32 [#allocation2], 4
      %s25 = int_to_ptr.vmem [resolvable:$true] %s24
      %30 = dma.hbm_to_vmem [thread:$0]  %s23, 1024, %s25, [#allocation3], 64, 64, 4
    $region9: #{retrain_dnn_forward.1} parent=1 // pred_fallthru
      _
    // Predicated region
    $region10: #{retrain_dnn_forward.1} parent=1 // pred_check
      _
    $region11: #{retrain_dnn_forward.1} parent=1 // pred_check_branch
      %32 = sbr.rel (0) target = $region13
    $region12: #{retrain_dnn_forward.1} parent=1 // pred_region
      %34 = vsyncadd [#allocation6], 0
      %s35 = sshll.u32 %s2, 4
      %s36 = int_to_ptr.hbm [resolvable:$true] %s35
      %s37 = sshll.u32 [#allocation5], 4
      %s38 = int_to_ptr.vmem [resolvable:$true] %s37
      %43 = dma.hbm_to_vmem [thread:$0]  %s36, 1024, %s38, [#allocation6], 64, 64, 4
    $region13: #{retrain_dnn_forward.1} parent=1 // pred_fallthru
      _
    // Predicated region
    $region14: #{retrain_dnn_forward.1} parent=1 // pred_check
      _
    $region15: #{retrain_dnn_forward.1} parent=1 // pred_check_branch
      %45 = sbr.rel (0) target = $region17
    $region16: #{retrain_dnn_forward.1} parent=1 // pred_region
      %47 = vsyncadd [#allocation6], 0
      %s48 = sshll.u32 %s3, 4
      %s49 = int_to_ptr.hbm [resolvable:$true] %s48
      %s50 = sshll.u32 [#allocation7], 4
      %s51 = int_to_ptr.vmem [resolvable:$true] %s50
      %56 = dma.hbm_to_vmem [thread:$0]  %s49, 1024, %s51, [#allocation6], 64, 64, 4
    $region17: #{retrain_dnn_forward.1} parent=1 // pred_fallthru
      _
    // Predicated region
    $region18: #{retrain_dnn_forward.1} parent=1 // pred_check
      _
    $region19: #{retrain_dnn_forward.1} parent=1 // pred_check_branch
      %58 = sbr.rel (0) target = $region21
    $region20: #{retrain_dnn_forward.1} parent=1 // pred_region
      _
    $region21: #{retrain_dnn_forward.1} parent=1 // pred_fallthru
      _
    // Predicated region
    $region22: #{retrain_dnn_forward.1} parent=1 // pred_check
      _
    $region23: #{retrain_dnn_forward.1} parent=1 // pred_check_branch
      %60 = sbr.rel (0) target = $region25
    $region24: #{retrain_dnn_forward.1} parent=1 // pred_region
      %62 = dma.done [#allocation3], 1024
    $region25: #{retrain_dnn_forward.1} parent=1 // pred_fallthru
      _
    // Predicated region
    $region26: #{retrain_dnn_forward.1} parent=1 // pred_check
      _
    $region27: #{retrain_dnn_forward.1} parent=1 // pred_check_branch
      %64 = sbr.rel (0) target = $region29
    $region28: #{retrain_dnn_forward.1} parent=1 // pred_region
      %66 = dma.done [#allocation6], 1024
    $region29: #{retrain_dnn_forward.1} parent=1 // pred_fallthru
      _
    // Predicated region
    $region30: #{retrain_dnn_forward.1} parent=1 // pred_check
      _
    $region31: #{retrain_dnn_forward.1} parent=1 // pred_check_branch
      %68 = sbr.rel (0) target = $region33
    $region32: #{retrain_dnn_forward.1} parent=1 // pred_region
      %70 = dma.done [#allocation6], 1024
    $region33: #{retrain_dnn_forward.1} parent=1 // pred_fallthru
      _
    %v71 = vld [vmem:[%s4] sm:$0x1]
    %v72 = vld [vmem:[%s4 + $0x1] sm:$0x1]
    %v73 = vld [vmem:[%s4 + $0x2] sm:$0x1]
    %v74 = vld [vmem:[%s0] sm:$0xf]
    %v75 = vld [vmem:[#allocation2] sm:$0xf]
    %v76 = vld [vmem:[#allocation2 + $0x4] sm:$0xf]
    %v77 = vld [vmem:[#allocation2 + $0x8] sm:$0xf]
    %v78 = vld [vmem:[#allocation2 + $0xc] sm:$0xf]
    %v79 = vld [vmem:[#allocation2 + $0x10] sm:$0xf]
    %v80 = vld [vmem:[#allocation2 + $0x14] sm:$0xf]
    %v81 = vld [vmem:[#allocation2 + $0x18] sm:$0xf]
    %v82 = vld [vmem:[#allocation2 + $0x1c] sm:$0xf]
    %v83 = vld [vmem:[#allocation2 + $0x20] sm:$0xf]
    %v84 = vld [vmem:[#allocation2 + $0x24] sm:$0xf]
    %v85 = vld [vmem:[#allocation2 + $0x28] sm:$0xf]
    %v86 = vld [vmem:[#allocation2 + $0x2c] sm:$0xf]
    %v87 = vld [vmem:[#allocation2 + $0x30] sm:$0xf]
    %v88 = vld [vmem:[#allocation2 + $0x34] sm:$0xf]
    %v89 = vld [vmem:[#allocation2 + $0x38] sm:$0xf]
    %v90 = vld [vmem:[#allocation2 + $0x3c] sm:$0xf]
    %v92 = vperm.slane %v71, 0
    %v110 = vunpack.c.l.b16 %v75
    %v111 = vunpack.c.l.b16 %v76
    %v112 = vunpack.c.l.b16 %v77
    %v113 = vunpack.c.l.b16 %v78
    %v114 = vunpack.c.l.b16 %v79
    %v115 = vunpack.c.l.b16 %v80
    %v116 = vunpack.c.l.b16 %v81
    %v117 = vunpack.c.l.b16 %v82
    %v118 = vunpack.c.l.b16 %v83
    %v119 = vunpack.c.l.b16 %v84
    %v120 = vunpack.c.l.b16 %v85
    %v121 = vunpack.c.l.b16 %v86
    %v122 = vunpack.c.l.b16 %v87
    %v123 = vunpack.c.l.b16 %v88
    %v124 = vunpack.c.l.b16 %v89
    %v125 = vunpack.c.l.b16 %v90
    %v126 = vpack.c.b16 %v111, %v110
    %v127 = vpack.c.b16 %v113, %v112
    %v128 = vpack.c.b16 %v115, %v114
    %v129 = vpack.c.b16 %v117, %v116
    %v130 = vpack.c.b16 %v119, %v118
    %v131 = vpack.c.b16 %v121, %v120
    %v132 = vpack.c.b16 %v123, %v122
    %v133 = vpack.c.b16 %v125, %v124
    %142 = vmatpush.bf16.msra.mxu0 %v133
    %143 = vmatpush.bf16.msra.mxu0 %v132
    %144 = vmatpush.bf16.msra.mxu0 %v131
    %145 = vmatpush.bf16.msra.mxu0 %v130
    %146 = vmatpush.bf16.msra.mxu0 %v129
    %147 = vmatpush.bf16.msra.mxu0 %v128
    %148 = vmatpush.bf16.msra.mxu0 %v127
    %149 = vmatpush.bf16.msra.mxu0 %v126
    %150 = vmatmul.bf16.gmra.mxu0 %v74
    %v151 = vpop.f32.mrf.mxu0
    %v152 = vadd.f32 %v92, %v151
    %v153 = vpop.f32.mrf.mxu0
    %154 = vdwg.mxu0
    %v155 = vmax.f32 %v152, 0.0
    %v156 = vpack.c.bf16 %v155, %v155
    %v157 = vld [vmem:[#allocation5] sm:$0xf]
    %v158 = vld [vmem:[#allocation5 + $0x4] sm:$0xf]
    %v159 = vld [vmem:[#allocation5 + $0x8] sm:$0xf]
    %v160 = vld [vmem:[#allocation5 + $0xc] sm:$0xf]
    %v161 = vld [vmem:[#allocation5 + $0x10] sm:$0xf]
    %v162 = vld [vmem:[#allocation5 + $0x14] sm:$0xf]
    %v163 = vld [vmem:[#allocation5 + $0x18] sm:$0xf]
    %v164 = vld [vmem:[#allocation5 + $0x1c] sm:$0xf]
    %v165 = vld [vmem:[#allocation5 + $0x20] sm:$0xf]
    %v166 = vld [vmem:[#allocation5 + $0x24] sm:$0xf]
    %v167 = vld [vmem:[#allocation5 + $0x28] sm:$0xf]
    %v168 = vld [vmem:[#allocation5 + $0x2c] sm:$0xf]
    %v169 = vld [vmem:[#allocation5 + $0x30] sm:$0xf]
    %v170 = vld [vmem:[#allocation5 + $0x34] sm:$0xf]
    %v171 = vld [vmem:[#allocation5 + $0x38] sm:$0xf]
    %v172 = vld [vmem:[#allocation5 + $0x3c] sm:$0xf]
    %v174 = vperm.slane %v72, 0
    %v192 = vunpack.c.l.b16 %v157
    %v193 = vunpack.c.l.b16 %v158
    %v194 = vunpack.c.l.b16 %v159
    %v195 = vunpack.c.l.b16 %v160
    %v196 = vunpack.c.l.b16 %v161
    %v197 = vunpack.c.l.b16 %v162
    %v198 = vunpack.c.l.b16 %v163
    %v199 = vunpack.c.l.b16 %v164
    %v200 = vunpack.c.l.b16 %v165
    %v201 = vunpack.c.l.b16 %v166
    %v202 = vunpack.c.l.b16 %v167
    %v203 = vunpack.c.l.b16 %v168
    %v204 = vunpack.c.l.b16 %v169
    %v205 = vunpack.c.l.b16 %v170
    %v206 = vunpack.c.l.b16 %v171
    %v207 = vunpack.c.l.b16 %v172
    %v208 = vpack.c.b16 %v193, %v192
    %v209 = vpack.c.b16 %v195, %v194
    %v210 = vpack.c.b16 %v197, %v196
    %v211 = vpack.c.b16 %v199, %v198
    %v212 = vpack.c.b16 %v201, %v200
    %v213 = vpack.c.b16 %v203, %v202
    %v214 = vpack.c.b16 %v205, %v204
    %v215 = vpack.c.b16 %v207, %v206
    %224 = vmatpush.bf16.msra.mxu0 %v215
    %225 = vmatpush.bf16.msra.mxu0 %v214
    %226 = vmatpush.bf16.msra.mxu0 %v213
    %227 = vmatpush.bf16.msra.mxu0 %v212
    %228 = vmatpush.bf16.msra.mxu0 %v211
    %229 = vmatpush.bf16.msra.mxu0 %v210
    %230 = vmatpush.bf16.msra.mxu0 %v209
    %231 = vmatpush.bf16.msra.mxu0 %v208
    %232 = vmatmul.bf16.gmra.mxu0 %v156
    %v233 = vpop.f32.mrf.mxu0
    %v234 = vadd.f32 %v174, %v233
    %v235 = vpop.f32.mrf.mxu0
    %236 = vdwg.mxu0
    %v237 = vpack.c.bf16 %v234, %v234
    %v238 = vld [vmem:[#allocation7] sm:$0xf]
    %v239 = vld [vmem:[#allocation7 + $0x4] sm:$0xf]
    %v240 = vld [vmem:[#allocation7 + $0x8] sm:$0xf]
    %v241 = vld [vmem:[#allocation7 + $0xc] sm:$0xf]
    %v242 = vld [vmem:[#allocation7 + $0x10] sm:$0xf]
    %v243 = vld [vmem:[#allocation7 + $0x14] sm:$0xf]
    %v244 = vld [vmem:[#allocation7 + $0x18] sm:$0xf]
    %v245 = vld [vmem:[#allocation7 + $0x1c] sm:$0xf]
    %v246 = vld [vmem:[#allocation7 + $0x20] sm:$0xf]
    %v247 = vld [vmem:[#allocation7 + $0x24] sm:$0xf]
    %v248 = vld [vmem:[#allocation7 + $0x28] sm:$0xf]
    %v249 = vld [vmem:[#allocation7 + $0x2c] sm:$0xf]
    %v250 = vld [vmem:[#allocation7 + $0x30] sm:$0xf]
    %v251 = vld [vmem:[#allocation7 + $0x34] sm:$0xf]
    %v252 = vld [vmem:[#allocation7 + $0x38] sm:$0xf]
    %v253 = vld [vmem:[#allocation7 + $0x3c] sm:$0xf]
    %v255 = vperm.slane %v73, 0
    %v273 = vunpack.c.l.b16 %v238
    %v274 = vunpack.c.l.b16 %v239
    %v275 = vunpack.c.l.b16 %v240
    %v276 = vunpack.c.l.b16 %v241
    %v277 = vunpack.c.l.b16 %v242
    %v278 = vunpack.c.l.b16 %v243
    %v279 = vunpack.c.l.b16 %v244
    %v280 = vunpack.c.l.b16 %v245
    %v281 = vunpack.c.l.b16 %v246
    %v282 = vunpack.c.l.b16 %v247
    %v283 = vunpack.c.l.b16 %v248
    %v284 = vunpack.c.l.b16 %v249
    %v285 = vunpack.c.l.b16 %v250
    %v286 = vunpack.c.l.b16 %v251
    %v287 = vunpack.c.l.b16 %v252
    %v288 = vunpack.c.l.b16 %v253
    %v289 = vpack.c.b16 %v274, %v273
    %v290 = vpack.c.b16 %v276, %v275
    %v291 = vpack.c.b16 %v278, %v277
    %v292 = vpack.c.b16 %v280, %v279
    %v293 = vpack.c.b16 %v282, %v281
    %v294 = vpack.c.b16 %v284, %v283
    %v295 = vpack.c.b16 %v286, %v285
    %v296 = vpack.c.b16 %v288, %v287
    %305 = vmatpush.bf16.msra.mxu0 %v296
    %306 = vmatpush.bf16.msra.mxu0 %v295
    %307 = vmatpush.bf16.msra.mxu0 %v294
    %308 = vmatpush.bf16.msra.mxu0 %v293
    %309 = vmatpush.bf16.msra.mxu0 %v292
    %310 = vmatpush.bf16.msra.mxu0 %v291
    %311 = vmatpush.bf16.msra.mxu0 %v290
    %312 = vmatpush.bf16.msra.mxu0 %v289
    %313 = vmatmul.bf16.gmra.mxu0 %v237
    %v314 = vpop.f32.mrf.mxu0
    %v315 = vadd.f32 %v255, %v314
    %v316 = vpop.f32.mrf.mxu0
    %317 = vdwg.mxu0
    %318 = vst [vmem:[#allocation8] sm:$0xff] %v234
    %319 = vst [vmem:[#allocation9] sm:$0xff] %v315
    // Predicated region
    $region34: #{retrain_dnn_forward.1} parent=1 // pred_check
      _
    $region35: #{retrain_dnn_forward.1} parent=1 // pred_check_branch
      %321 = sbr.rel (0) target = $region37
    $region36: #{retrain_dnn_forward.1} parent=1 // pred_region
      %323 = vsyncadd [#allocation4], 0
      %s325 = sshll.u32 [#allocation8], 4
      %s326 = int_to_ptr.vmem [resolvable:$true] %s325
      %s327 = sshll.u32 %s5, 4
      %s328 = int_to_ptr.hbm [resolvable:$true] %s327
      %330 = dma.vmem_to_hbm [thread:$0]  %s326, 128, %s328, [#allocation4]
    $region37: #{retrain_dnn_forward.1} parent=1 // pred_fallthru
      _
    // Predicated region
    $region38: #{retrain_dnn_forward.1} parent=1 // pred_check
      _
    $region39: #{retrain_dnn_forward.1} parent=1 // pred_check_branch
      %332 = sbr.rel (0) target = $region41
    $region40: #{retrain_dnn_forward.1} parent=1 // pred_region
      %334 = vsyncadd [#allocation10], 0
      %s336 = sshll.u32 [#allocation9], 4
      %s337 = int_to_ptr.vmem [resolvable:$true] %s336
      %s338 = sshll.u32 %s6, 4
      %s339 = int_to_ptr.hbm [resolvable:$true] %s338
      %341 = dma.vmem_to_hbm [thread:$0]  %s337, 128, %s339, [#allocation10]
    $region41: #{retrain_dnn_forward.1} parent=1 // pred_fallthru
      _
    // Predicated region
    $region42: #{retrain_dnn_forward.1} parent=1 // pred_check
      _
    $region43: #{retrain_dnn_forward.1} parent=1 // pred_check_branch
      %343 = sbr.rel (0) target = $region45
    $region44: #{retrain_dnn_forward.1} parent=1 // pred_region
      %345 = dma.done [#allocation4], 128
    $region45: #{retrain_dnn_forward.1} parent=1 // pred_fallthru
      _
    // Predicated region
    $region46: #{retrain_dnn_forward.1} parent=1 // pred_check
      _
    $region47: #{retrain_dnn_forward.1} parent=1 // pred_check_branch
      %347 = sbr.rel (0) target = $region49
    $region48: #{retrain_dnn_forward.1} parent=1 // pred_region
      %349 = dma.done [#allocation10], 128
    $region49: #{retrain_dnn_forward.1} parent=1 // pred_fallthru
      _
    %350 = vsyncpa [#allocation3], 1
    %351 = vsyncpa [#allocation6], 1
    %352 = vsyncpa [#allocation4], 1
    %353 = vsyncpa [#allocation10], 1

// kernel: retrain_dnn_forward.1
$region0: #{retrain_dnn_forward.1}
  #allocation0 [shape = 'u32[]', space=smem, size = 0x4, offset = 0x4, fixed_abs, tag = 'smem constant byte address 0x4 - core index']
  #allocation1 [shape = 'u32[72,128]{1,0:T(1,128)}', space=vmem, size = 0x9000, scoped, tag = 'internal scratch']
  %s0 = inlined_call_operand.vmem [shape: bf16[8,128], index: 0, kind: input, shape index: {}]
  %s1 = inlined_call_operand.hbm [shape: bf16[128,128], index: 1, kind: input, shape index: {}]
  %s2 = inlined_call_operand.hbm [shape: bf16[128,128], index: 2, kind: input, shape index: {}]
  %s3 = inlined_call_operand.hbm [shape: bf16[128,128], index: 3, kind: input, shape index: {}]
  %s4 = inlined_call_operand.vmem [shape: f32[1,384], index: 4, kind: input, shape index: {}]
  %s5 = inlined_call_operand.hbm [shape: f32[8,128], index: 5, kind: output, shape index: {0}]
  %s6 = inlined_call_operand.hbm [shape: f32[8,128], index: 6, kind: output, shape index: {1}]
  %7 = xla_tuple %s5, %s6
  %s8 = sld [smem:[#allocation0]]
  $region50: #{retrain_dnn_forward.1} parent=0
    _
  %s10 = ssub.s32 1, %s8
  %s11 = scalar_select 0, %s10, %s8
  $region1: #{retrain_dnn_forward.1} parent=0
    #allocation2 [shape = 'u8[32768]{0}', space=vmem, size = 0x8000, scoped, tag = 'input window, operand 1, single buffered']
    #allocation3 [shape = 's32[1]{0}', space=sflag, size = 0x4, scoped, tag = 'scoped memory for retrain_dnn_forward.1']
    #allocation4 [shape = 's32[1]{0}', space=sflag, size = 0x4, scoped, tag = 'scoped memory for retrain_dnn_forward.1']
    #allocation5 [shape = 'u8[32768]{0}', space=vmem, size = 0x8000, scoped, tag = 'input window, operand 2, single buffered']
    #allocation6 [shape = 's32[1]{0}', space=sflag, size = 0x4, scoped, tag = 'scoped memory for retrain_dnn_forward.1']
    #allocation7 [shape = 'u8[32768]{0}', space=vmem, size = 0x8000, scoped, tag = 'input window, operand 3, single buffered']
    #allocation8 [shape = 'u8[4096]{0}', space=vmem, size = 0x1000, scoped, tag = 'output window, operand 0, single buffered']
    #allocation9 [shape = 'u8[4096]{0}', space=vmem, size = 0x1000, scoped, tag = 'output window, operand 1, single buffered']
    #allocation10 [shape = 's32[1]{0}', space=sflag, size = 0x4, scoped, tag = 'scoped memory for retrain_dnn_forward.1']
    %12 = vsyncpa [#allocation3], 0
    %13 = vsyncpa [#allocation6], 0
    %14 = vsyncpa [#allocation4], 0
    %15 = vsyncpa [#allocation10], 0
    // Predicated region
    $region2: #{retrain_dnn_forward.1} parent=1 // pred_check
      _
    $region3: #{retrain_dnn_forward.1} parent=1 // pred_check_branch
      %17 = sbr.rel (0) target = $region5
    $region4: #{retrain_dnn_forward.1} parent=1 // pred_region
      _
    $region5: #{retrain_dnn_forward.1} parent=1 // pred_fallthru
      _
    // Predicated region
    $region6: #{retrain_dnn_forward.1} parent=1 // pred_check
      _
    $region7: #{retrain_dnn_forward.1} parent=1 // pred_check_branch
      %19 = sbr.rel (0) target = $region9
    $region8: #{retrain_dnn_forward.1} parent=1 // pred_region
      %21 = vsyncadd [#allocation3], 0
      %s22 = sshll.u32 %s1, 4
      %s23 = int_to_ptr.hbm [resolvable:$true] %s22
      %s24 = sshll.u32 [#allocation2], 4
      %s25 = int_to_ptr.vmem [resolvable:$true] %s24
      %30 = dma.hbm_to_vmem [thread:$0]  %s23, 1024, %s25, [#allocation3], 64, 64, 4
    $region9: #{retrain_dnn_forward.1} parent=1 // pred_fallthru
      _
    // Predicated region
    $region10: #{retrain_dnn_forward.1} parent=1 // pred_check
      _
    $region11: #{retrain_dnn_forward.1} parent=1 // pred_check_branch
      %32 = sbr.rel (0) target = $region13
    $region12: #{retrain_dnn_forward.1} parent=1 // pred_region
      %34 = vsyncadd [#allocation6], 0
      %s35 = sshll.u32 %s2, 4
      %s36 = int_to_ptr.hbm [resolvable:$true] %s35
      %s37 = sshll.u32 [#allocation5], 4
      %s38 = int_to_ptr.vmem [resolvable:$true] %s37
      %43 = dma.hbm_to_vmem [thread:$0]  %s36, 1024, %s38, [#allocation6], 64, 64, 4
    $region13: #{retrain_dnn_forward.1} parent=1 // pred_fallthru
      _
    // Predicated region
    $region14: #{retrain_dnn_forward.1} parent=1 // pred_check
      _
    $region15: #{retrain_dnn_forward.1} parent=1 // pred_check_branch
      %45 = sbr.rel (0) target = $region17
    $region16: #{retrain_dnn_forward.1} parent=1 // pred_region
      %47 = vsyncadd [#allocation6], 0
      %s48 = sshll.u32 %s3, 4
      %s49 = int_to_ptr.hbm [resolvable:$true] %s48
      %s50 = sshll.u32 [#allocation7], 4
      %s51 = int_to_ptr.vmem [resolvable:$true] %s50
      %56 = dma.hbm_to_vmem [thread:$0]  %s49, 1024, %s51, [#allocation6], 64, 64, 4
    $region17: #{retrain_dnn_forward.1} parent=1 // pred_fallthru
      _
    // Predicated region
    $region18: #{retrain_dnn_forward.1} parent=1 // pred_check
      _
    $region19: #{retrain_dnn_forward.1} parent=1 // pred_check_branch
      %58 = sbr.rel (0) target = $region21
    $region20: #{retrain_dnn_forward.1} parent=1 // pred_region
      _
    $region21: #{retrain_dnn_forward.1} parent=1 // pred_fallthru
      _
    // Predicated region
    $region22: #{retrain_dnn_forward.1} parent=1 // pred_check
      _
    $region23: #{retrain_dnn_forward.1} parent=1 // pred_check_branch
      %60 = sbr.rel (0) target = $region25
    $region24: #{retrain_dnn_forward.1} parent=1 // pred_region
      %62 = dma.done [#allocation3], 1024
    $region25: #{retrain_dnn_forward.1} parent=1 // pred_fallthru
      _
    // Predicated region
    $region26: #{retrain_dnn_forward.1} parent=1 // pred_check
      _
    $region27: #{retrain_dnn_forward.1} parent=1 // pred_check_branch
      %64 = sbr.rel (0) target = $region29
    $region28: #{retrain_dnn_forward.1} parent=1 // pred_region
      %66 = dma.done [#allocation6], 1024
    $region29: #{retrain_dnn_forward.1} parent=1 // pred_fallthru
      _
    // Predicated region
    $region30: #{retrain_dnn_forward.1} parent=1 // pred_check
      _
    $region31: #{retrain_dnn_forward.1} parent=1 // pred_check_branch
      %68 = sbr.rel (0) target = $region33
    $region32: #{retrain_dnn_forward.1} parent=1 // pred_region
      %70 = dma.done [#allocation6], 1024
    $region33: #{retrain_dnn_forward.1} parent=1 // pred_fallthru
      _
    %v71 = vld [vmem:[%s4] sm:$0x1]
    %v72 = vld [vmem:[%s4 + $0x1] sm:$0x1]
    %v73 = vld [vmem:[%s4 + $0x2] sm:$0x1]
    %v74 = vld [vmem:[%s0] sm:$0xf]
    %v75 = vld [vmem:[#allocation2] sm:$0xf]
    %v76 = vld [vmem:[#allocation2 + $0x4] sm:$0xf]
    %v77 = vld [vmem:[#allocation2 + $0x8] sm:$0xf]
    %v78 = vld [vmem:[#allocation2 + $0xc] sm:$0xf]
    %v79 = vld [vmem:[#allocation2 + $0x10] sm:$0xf]
    %v80 = vld [vmem:[#allocation2 + $0x14] sm:$0xf]
    %v81 = vld [vmem:[#allocation2 + $0x18] sm:$0xf]
    %v82 = vld [vmem:[#allocation2 + $0x1c] sm:$0xf]
    %v83 = vld [vmem:[#allocation2 + $0x20] sm:$0xf]
    %v84 = vld [vmem:[#allocation2 + $0x24] sm:$0xf]
    %v85 = vld [vmem:[#allocation2 + $0x28] sm:$0xf]
    %v86 = vld [vmem:[#allocation2 + $0x2c] sm:$0xf]
    %v87 = vld [vmem:[#allocation2 + $0x30] sm:$0xf]
    %v88 = vld [vmem:[#allocation2 + $0x34] sm:$0xf]
    %v89 = vld [vmem:[#allocation2 + $0x38] sm:$0xf]
    %v90 = vld [vmem:[#allocation2 + $0x3c] sm:$0xf]
    %v92 = vperm.slane %v71, 0
    %v110 = vunpack.c.l.b16 %v75
    %v111 = vunpack.c.l.b16 %v76
    %v112 = vunpack.c.l.b16 %v77
    %v113 = vunpack.c.l.b16 %v78
    %v114 = vunpack.c.l.b16 %v79
    %v115 = vunpack.c.l.b16 %v80
    %v116 = vunpack.c.l.b16 %v81
    %v117 = vunpack.c.l.b16 %v82
    %v118 = vunpack.c.l.b16 %v83
    %v119 = vunpack.c.l.b16 %v84
    %v120 = vunpack.c.l.b16 %v85
    %v121 = vunpack.c.l.b16 %v86
    %v122 = vunpack.c.l.b16 %v87
    %v123 = vunpack.c.l.b16 %v88
    %v124 = vunpack.c.l.b16 %v89
    %v125 = vunpack.c.l.b16 %v90
    %v126 = vpack.c.b16 %v111, %v110
    %v127 = vpack.c.b16 %v113, %v112
    %v128 = vpack.c.b16 %v115, %v114
    %v129 = vpack.c.b16 %v117, %v116
    %v130 = vpack.c.b16 %v119, %v118
    %v131 = vpack.c.b16 %v121, %v120
    %v132 = vpack.c.b16 %v123, %v122
    %v133 = vpack.c.b16 %v125, %v124
    %142 = vmatpush.bf16.msra.mxu0 %v133
    %143 = vmatpush.bf16.msra.mxu0 %v132
    %144 = vmatpush.bf16.msra.mxu0 %v131
    %145 = vmatpush.bf16.msra.mxu0 %v130
    %146 = vmatpush.bf16.msra.mxu0 %v129
    %147 = vmatpush.bf16.msra.mxu0 %v128
    %148 = vmatpush.bf16.msra.mxu0 %v127
    %149 = vmatpush.bf16.msra.mxu0 %v126
    %150 = vmatmul.bf16.gmra.mxu0 %v74
    %v151 = vpop.f32.mrf.mxu0
    %v152 = vadd.f32 %v92, %v151
    %v153 = vpop.f32.mrf.mxu0
    %154 = vdwg.mxu0
    %v155 = vmax.f32 %v152, 0.0
    %v156 = vpack.c.bf16 %v155, %v155
    %v157 = vld [vmem:[#allocation5] sm:$0xf]
    %v158 = vld [vmem:[#allocation5 + $0x4] sm:$0xf]
    %v159 = vld [vmem:[#allocation5 + $0x8] sm:$0xf]
    %v160 = vld [vmem:[#allocation5 + $0xc] sm:$0xf]
    %v161 = vld [vmem:[#allocation5 + $0x10] sm:$0xf]
    %v162 = vld [vmem:[#allocation5 + $0x14] sm:$0xf]
    %v163 = vld [vmem:[#allocation5 + $0x18] sm:$0xf]
    %v164 = vld [vmem:[#allocation5 + $0x1c] sm:$0xf]
    %v165 = vld [vmem:[#allocation5 + $0x20] sm:$0xf]
    %v166 = vld [vmem:[#allocation5 + $0x24] sm:$0xf]
    %v167 = vld [vmem:[#allocation5 + $0x28] sm:$0xf]
    %v168 = vld [vmem:[#allocation5 + $0x2c] sm:$0xf]
    %v169 = vld [vmem:[#allocation5 + $0x30] sm:$0xf]
    %v170 = vld [vmem:[#allocation5 + $0x34] sm:$0xf]
    %v171 = vld [vmem:[#allocation5 + $0x38] sm:$0xf]
    %v172 = vld [vmem:[#allocation5 + $0x3c] sm:$0xf]
    %v174 = vperm.slane %v72, 0
    %v192 = vunpack.c.l.b16 %v157
    %v193 = vunpack.c.l.b16 %v158
    %v194 = vunpack.c.l.b16 %v159
    %v195 = vunpack.c.l.b16 %v160
    %v196 = vunpack.c.l.b16 %v161
    %v197 = vunpack.c.l.b16 %v162
    %v198 = vunpack.c.l.b16 %v163
    %v199 = vunpack.c.l.b16 %v164
    %v200 = vunpack.c.l.b16 %v165
    %v201 = vunpack.c.l.b16 %v166
    %v202 = vunpack.c.l.b16 %v167
    %v203 = vunpack.c.l.b16 %v168
    %v204 = vunpack.c.l.b16 %v169
    %v205 = vunpack.c.l.b16 %v170
    %v206 = vunpack.c.l.b16 %v171
    %v207 = vunpack.c.l.b16 %v172
    %v208 = vpack.c.b16 %v193, %v192
    %v209 = vpack.c.b16 %v195, %v194
    %v210 = vpack.c.b16 %v197, %v196
    %v211 = vpack.c.b16 %v199, %v198
    %v212 = vpack.c.b16 %v201, %v200
    %v213 = vpack.c.b16 %v203, %v202
    %v214 = vpack.c.b16 %v205, %v204
    %v215 = vpack.c.b16 %v207, %v206
    %224 = vmatpush.bf16.msra.mxu0 %v215
    %225 = vmatpush.bf16.msra.mxu0 %v214
    %226 = vmatpush.bf16.msra.mxu0 %v213
    %227 = vmatpush.bf16.msra.mxu0 %v212
    %228 = vmatpush.bf16.msra.mxu0 %v211
    %229 = vmatpush.bf16.msra.mxu0 %v210
    %230 = vmatpush.bf16.msra.mxu0 %v209
    %231 = vmatpush.bf16.msra.mxu0 %v208
    %232 = vmatmul.bf16.gmra.mxu0 %v156
    %v233 = vpop.f32.mrf.mxu0
    %v234 = vadd.f32 %v174, %v233
    %v235 = vpop.f32.mrf.mxu0
    %236 = vdwg.mxu0
    %v237 = vpack.c.bf16 %v234, %v234
    %v238 = vld [vmem:[#allocation7] sm:$0xf]
    %v239 = vld [vmem:[#allocation7 + $0x4] sm:$0xf]
    %v240 = vld [vmem:[#allocation7 + $0x8] sm:$0xf]
    %v241 = vld [vmem:[#allocation7 + $0xc] sm:$0xf]
    %v242 = vld [vmem:[#allocation7 + $0x10] sm:$0xf]
    %v243 = vld [vmem:[#allocation7 + $0x14] sm:$0xf]
    %v244 = vld [vmem:[#allocation7 + $0x18] sm:$0xf]
    %v245 = vld [vmem:[#allocation7 + $0x1c] sm:$0xf]
    %v246 = vld [vmem:[#allocation7 + $0x20] sm:$0xf]
    %v247 = vld [vmem:[#allocation7 + $0x24] sm:$0xf]
    %v248 = vld [vmem:[#allocation7 + $0x28] sm:$0xf]
    %v249 = vld [vmem:[#allocation7 + $0x2c] sm:$0xf]
    %v250 = vld [vmem:[#allocation7 + $0x30] sm:$0xf]
    %v251 = vld [vmem:[#allocation7 + $0x34] sm:$0xf]
    %v252 = vld [vmem:[#allocation7 + $0x38] sm:$0xf]
    %v253 = vld [vmem:[#allocation7 + $0x3c] sm:$0xf]
    %v255 = vperm.slane %v73, 0
    %v273 = vunpack.c.l.b16 %v238
    %v274 = vunpack.c.l.b16 %v239
    %v275 = vunpack.c.l.b16 %v240
    %v276 = vunpack.c.l.b16 %v241
    %v277 = vunpack.c.l.b16 %v242
    %v278 = vunpack.c.l.b16 %v243
    %v279 = vunpack.c.l.b16 %v244
    %v280 = vunpack.c.l.b16 %v245
    %v281 = vunpack.c.l.b16 %v246
    %v282 = vunpack.c.l.b16 %v247
    %v283 = vunpack.c.l.b16 %v248
    %v284 = vunpack.c.l.b16 %v249
    %v285 = vunpack.c.l.b16 %v250
    %v286 = vunpack.c.l.b16 %v251
    %v287 = vunpack.c.l.b16 %v252
    %v288 = vunpack.c.l.b16 %v253
    %v289 = vpack.c.b16 %v274, %v273
    %v290 = vpack.c.b16 %v276, %v275
    %v291 = vpack.c.b16 %v278, %v277
    %v292 = vpack.c.b16 %v280, %v279
    %v293 = vpack.c.b16 %v282, %v281
    %v294 = vpack.c.b16 %v284, %v283
    %v295 = vpack.c.b16 %v286, %v285
    %v296 = vpack.c.b16 %v288, %v287
    %305 = vmatpush.bf16.msra.mxu0 %v296
    %306 = vmatpush.bf16.msra.mxu0 %v295
    %307 = vmatpush.bf16.msra.mxu0 %v294
    %308 = vmatpush.bf16.msra.mxu0 %v293
    %309 = vmatpush.bf16.msra.mxu0 %v292
    %310 = vmatpush.bf16.msra.mxu0 %v291
    %311 = vmatpush.bf16.msra.mxu0 %v290
    %312 = vmatpush.bf16.msra.mxu0 %v289
    %313 = vmatmul.bf16.gmra.mxu0 %v237
    %v314 = vpop.f32.mrf.mxu0
    %v315 = vadd.f32 %v255, %v314
    %v316 = vpop.f32.mrf.mxu0
    %317 = vdwg.mxu0
    %318 = vst [vmem:[#allocation8] sm:$0xff] %v234
    %319 = vst [vmem:[#allocation9] sm:$0xff] %v315
    // Predicated region
    $region34: #{retrain_dnn_forward.1} parent=1 // pred_check
      _
    $region35: #{retrain_dnn_forward.1} parent=1 // pred_check_branch
      %321 = sbr.rel (0) target = $region37
    $region36: #{retrain_dnn_forward.1} parent=1 // pred_region
      %323 = vsyncadd [#allocation4], 0
      %s325 = sshll.u32 [#allocation8], 4
      %s326 = int_to_ptr.vmem [resolvable:$true] %s325
      %s327 = sshll.u32 %s5, 4
      %s328 = int_to_ptr.hbm [resolvable:$true] %s327
      %330 = dma.vmem_to_hbm [thread:$0]  %s326, 128, %s328, [#allocation4]
    $region37: #{retrain_dnn_forward.1} parent=1 // pred_fallthru
      _
    // Predicated region
    $region38: #{retrain_dnn_forward.1} parent=1 // pred_check
      _
    $region39: #{retrain_dnn_forward.1} parent=1 // pred_check_branch
      %332 = sbr.rel (0) target = $region41
    $region40: #{retrain_dnn_forward.1} parent=1 // pred_region
      %334 = vsyncadd [#allocation10], 0
      %s336 = sshll.u32 [#allocation9], 4
      %s337 = int_to_ptr.vmem [resolvable:$true] %s336
      %s338 = sshll.u32 %s6, 4
      %s339 = int_to_ptr.hbm [resolvable:$true] %s338
      %341 = dma.vmem_to_hbm [thread:$0]  %s337, 128, %s339, [#allocation10]
    $region41: #{retrain_dnn_forward.1} parent=1 // pred_fallthru
      _
    // Predicated region
    $region42: #{retrain_dnn_forward.1} parent=1 // pred_check
      _
    $region43: #{retrain_dnn_forward.1} parent=1 // pred_check_branch
      %343 = sbr.rel (0) target = $region45
    $region44: #{retrain_dnn_forward.1} parent=1 // pred_region
      %345 = dma.done [#allocation4], 128
    $region45: #{retrain_dnn_forward.1} parent=1 // pred_fallthru
      _
    // Predicated region
    $region46: #{retrain_dnn_forward.1} parent=1 // pred_check
      _
    $region47: #{retrain_dnn_forward.1} parent=1 // pred_check_branch
      %347 = sbr.rel (0) target = $region49
    $region48: #{retrain_dnn_forward.1} parent=1 // pred_region
      %349 = dma.done [#allocation10], 128
    $region49: #{retrain_dnn_forward.1} parent=1 // pred_fallthru
      _
    %350 = vsyncpa [#allocation3], 1
    %351 = vsyncpa [#allocation6], 1
    %352 = vsyncpa [#allocation4], 1
    %353 = vsyncpa [#allocation10], 1

</llo_original>
